<compile_context>
chip_gen: v7x
topology: tpu7x:2x2x1
jax: 0.10.0
libtpu: 0.0.40
codegen_flags: <defaults>
</compile_context>

<pallas_src>
import jax
import jax.numpy as jnp
from jax import lax
from jax.experimental import pallas as pl
from jax.experimental.pallas import tpu as pltpu

HID_SIZE = 64
# Per-grid-step batch tile cap.  8 MiB of double-buffered x at f32 / 4 MiB at
# bf16 -- safe under the 32 MiB scoped VMEM limit on v5e/v6e/v7x.
MAX_TILE_B = 8192


def _critic_kernel(x_ref, w1_ref, w2_ref, aux_ref, out_ref):
    # x_ref:   (TILE_B, obs)      current batch tile (f32 or bf16)
    # w1_ref:  (HID, obs)         PyTorch (out, in) layout, same dtype as x
    # w2_ref:  (HID, HID)         f32
    # aux_ref: (HID, 4)           [:,0]=b1, [:,1]=b2, [:,2]=w3 head weights, [0,3]=b3
    # out_ref: (1, 1, TILE_B)     critic values for this tile, batch along lanes
    x = x_ref[...]
    w1 = w1_ref[...]
    w2 = w2_ref[...]
    b1 = aux_ref[:, 0:1]          # (HID, 1) -> broadcasts over lanes
    b2 = aux_ref[:, 1:2]          # (HID, 1)
    w3 = aux_ref[:, 2:3]          # (HID, 1)
    b3 = aux_ref[0:1, 3:4]        # (1, 1)

    # Layer 1: h1 = relu(W1 @ x^T + b1), shape (HID, TILE_B).
    # Contract the last dims of both operands (MXU-native, no explicit
    # transpose); f32 accumulation regardless of input dtype.
    h1 = lax.dot_general(w1, x, (((1,), (1,)), ((), ())),
                         preferred_element_type=jnp.float32)
    h1 = jnp.maximum(h1 + b1, 0.0)

    # Layer 2: h2 = relu(W2 @ h1 + b2), shape (HID, TILE_B).
    h2 = jnp.dot(w2, h1, preferred_element_type=jnp.float32)
    h2 = jnp.maximum(h2 + b2, 0.0)

    # Head Linear(64 -> 1): VPU multiply + sublane (XLU) reduction instead of a
    # 1-wide MXU matmul; result (1, TILE_B) is lane-dense.
    v = jnp.sum(h2 * w3, axis=0, keepdims=True) + b3
    out_ref[0] = v.astype(out_ref.dtype)


def _round_up(n, m):
    return ((n + m - 1) // m) * m


def _choose_tile_b(B):
    """Pick the per-step batch tile.

    Small B: one tile, rounded to 16 (bf16-safe sublane multiple; overhead-bound
    anyway).  Larger B: at least two lane-dense (multiple-of-128) tiles so v7x
    can shard the 'parallel' batch axis across its two TensorCores, capped so
    the double-buffered x block stays small in VMEM.
    """
    if B <= 256:
        return _round_up(B, 16)
    half = _round_up(pl.cdiv(B, 2), 128)
    return min(MAX_TILE_B, half)


def model_critic_forward(x, params):
    """x: (B, obs_size) f32 or bf16. params: PyTorch-layout weights/biases.

    Returns (B, 1) in x.dtype.
    """
    B, obs = x.shape
    dtype = x.dtype

    tile_b = _choose_tile_b(B)
    num_tiles = pl.cdiv(B, tile_b)   # no pad copy: Pallas masks the OOB tail block

    # First-layer weight matches the activation dtype (bf16 matmul is MXU-native
    # on all generations); everything downstream of the f32 accumulator stays f32.
    w1 = params["w1"].astype(dtype)
    w2 = params["w2"].astype(jnp.float32)

    # Pack the three biases + the head weight column into one (HID, 4) operand.
    # (In production this packing would be precomputed once with the parameters.)
    b1 = params["b1"].reshape(HID_SIZE, 1)
    b2 = params["b2"].reshape(HID_SIZE, 1)
    w3 = params["w3"].reshape(1, HID_SIZE).T                       # (HID, 1)
    b3 = jnp.pad(params["b3"].reshape(1, 1), ((0, HID_SIZE - 1), (0, 0)))
    aux = jnp.concatenate([b1, b2, w3, b3], axis=1).astype(jnp.float32)

    out = pl.pallas_call(
        _critic_kernel,
        out_shape=jax.ShapeDtypeStruct((num_tiles, 1, tile_b), dtype),
        grid=(num_tiles,),
        in_specs=[
            pl.BlockSpec((tile_b, obs), lambda i: (i, 0)),           # x: tiled on batch
            pl.BlockSpec((HID_SIZE, obs), lambda i: (0, 0)),         # w1: VMEM-resident
            pl.BlockSpec((HID_SIZE, HID_SIZE), lambda i: (0, 0)),    # w2: VMEM-resident
            pl.BlockSpec((HID_SIZE, 4), lambda i: (0, 0)),           # packed biases + w3
        ],
        out_specs=pl.BlockSpec((1, 1, tile_b), lambda i: (i, 0, 0)),
        compiler_params=pltpu.CompilerParams(
            dimension_semantics=("parallel",),     # shard batch tiles across TCs on v7x
            vmem_limit_bytes=32 * 1024 * 1024,     # safe on v5e/v6e/v7x at TILE_B=8192
        ),
    )(x, w1, w2, aux)

    # (num_tiles, 1, tile_b) -> (B, 1): free layout plumbing; drops OOB-tail lanes.
    return out.reshape(-1)[:B].reshape(B, 1)


def init_params(key, obs_size):
    """PyTorch-Linear-style init: weights (out, in), uniform(-1/sqrt(fan_in), +)."""
    ks = jax.random.split(key, 6)

    def lin(kw, kb, fan_in, fan_out):
        bound = 1.0 / jnp.sqrt(jnp.float32(fan_in))
        w = jax.random.uniform(kw, (fan_out, fan_in), jnp.float32, -bound, bound)
        b = jax.random.uniform(kb, (fan_out,), jnp.float32, -bound, bound)
        return w, b

    w1, b1 = lin(ks[0], ks[1], obs_size, HID_SIZE)
    w2, b2 = lin(ks[2], ks[3], HID_SIZE, HID_SIZE)
    w3, b3 = lin(ks[4], ks[5], HID_SIZE, 1)
    return {"w1": w1, "b1": b1, "w2": w2, "b2": b2, "w3": w3, "b3": b3}


def _reference_forward(x, p):
    h1 = jnp.maximum(x @ p["w1"].T + p["b1"], 0.0)
    h2 = jnp.maximum(h1 @ p["w2"].T + p["b2"], 0.0)
    return h2 @ p["w3"].T + p["b3"]


if __name__ == "__main__":
    key = jax.random.PRNGKey(0)
    k_param, k_x1, k_x2, k_x3 = jax.random.split(key, 4)

    batch = 8
    obs_size = 16
    params = init_params(k_param, obs_size)

    # Small batch (single tile, OOB tail of 8 rows).
    x = jax.random.normal(k_x1, (batch, obs_size), jnp.float32)
    out = jax.block_until_ready(model_critic_forward(x, params))
    ref = _reference_forward(x, params)
    assert out.shape == (batch, 1)
    assert jnp.allclose(out, ref, atol=1e-4, rtol=1e-4)

    # Ragged batch (exercises the masked OOB-tail path, no pad copy).
    x2 = jax.random.normal(k_x2, (37, obs_size), jnp.float32)
    out2 = jax.block_until_ready(model_critic_forward(x2, params))
    ref2 = _reference_forward(x2, params)
    assert out2.shape == (37, 1)
    assert jnp.allclose(out2, ref2, atol=1e-4, rtol=1e-4)

    # Moderate batch: two lane-dense tiles (exercises the multi-tile / v7x path).
    x3 = jax.random.normal(k_x3, (300, obs_size), jnp.float32)
    out3 = jax.block_until_ready(model_critic_forward(x3, params))
    ref3 = _reference_forward(x3, params)
    assert out3.shape == (300, 1)
    assert jnp.allclose(out3, ref3, atol=1e-4, rtol=1e-4)

    # bf16 input path (halved HBM traffic); f32 accumulation inside the kernel.
    x_bf = x2.astype(jnp.bfloat16)
    out_bf = jax.block_until_ready(model_critic_forward(x_bf, params))
    ref_bf = _reference_forward(x_bf.astype(jnp.float32), params)
    assert out_bf.shape == (37, 1)
    assert jnp.allclose(out_bf.astype(jnp.float32), ref_bf, atol=5e-2, rtol=5e-2)

    print("KERNEL_OK")
</pallas_src>

<mosaic_0001>
module attributes {stable_mosaic.version = 11 : i64} {
  func.func @_critic_kernel(%arg0: i32, %arg1: memref<16x16xf32, #tpu.memory_space<vmem>>, %arg2: memref<64x16xf32, #tpu.memory_space<vmem>>, %arg3: memref<64x64xf32, #tpu.memory_space<vmem>>, %arg4: memref<64x4xf32, #tpu.memory_space<vmem>>, %arg5: memref<1x1x16xf32, #tpu.memory_space<vmem>>) attributes {dimension_semantics = [#tpu.dimension_semantics<parallel>], iteration_bounds = array<i64: 1>, scalar_prefetch = 0 : i64, scratch_operands = 0 : i64, tpu.core_type = #tpu.core_type<tc>, window_params = [{transform_indices = @transform_0, window_bounds = array<i64: 16, 16>}, {pipeline_mode = #tpu.pipeline_mode<synchronous>, transform_indices = @transform_1, window_bounds = array<i64: 64, 16>}, {pipeline_mode = #tpu.pipeline_mode<synchronous>, transform_indices = @transform_2, window_bounds = array<i64: 64, 64>}, {pipeline_mode = #tpu.pipeline_mode<synchronous>, transform_indices = @transform_3, window_bounds = array<i64: 64, 4>}, {transform_indices = @transform_4, window_bounds = array<i64: 1, 1, 16>}]} {
    %c0 = arith.constant 0 : index
    %c0_0 = arith.constant 0 : index
    %0 = vector.load %arg1[%c0, %c0_0] : memref<16x16xf32, #tpu.memory_space<vmem>>, vector<16x16xf32>
    %c0_1 = arith.constant 0 : index
    %c0_2 = arith.constant 0 : index
    %1 = vector.load %arg2[%c0_1, %c0_2] : memref<64x16xf32, #tpu.memory_space<vmem>>, vector<64x16xf32>
    %c0_3 = arith.constant 0 : index
    %c0_4 = arith.constant 0 : index
    %2 = vector.load %arg3[%c0_3, %c0_4] : memref<64x64xf32, #tpu.memory_space<vmem>>, vector<64x64xf32>
    %c0_5 = arith.constant 0 : index
    %c0_6 = arith.constant 0 : index
    %3 = vector.load %arg4[%c0_5, %c0_6] : memref<64x4xf32, #tpu.memory_space<vmem>>, vector<64x1xf32>
    %c0_7 = arith.constant 0 : index
    %c1 = arith.constant 1 : index
    %4 = vector.load %arg4[%c0_7, %c1] : memref<64x4xf32, #tpu.memory_space<vmem>>, vector<64x1xf32>
    %c0_8 = arith.constant 0 : index
    %c2 = arith.constant 2 : index
    %5 = vector.load %arg4[%c0_8, %c2] : memref<64x4xf32, #tpu.memory_space<vmem>>, vector<64x1xf32>
    %c0_9 = arith.constant 0 : index
    %c3 = arith.constant 3 : index
    %6 = vector.load %arg4[%c0_9, %c3] : memref<64x4xf32, #tpu.memory_space<vmem>>, vector<1x1xf32>
    %cst = arith.constant dense<0.000000e+00> : vector<64x16xf32>
    %7 = tpu.matmul %1, %0, %cst {dimension_numbers = #tpu.dot_dimension_numbers<[1], [1], [0], [0], [0, 0, 1, 0], [], []>} : vector<64x16xf32>, vector<16x16xf32>, vector<64x16xf32> -> vector<64x16xf32>
    %8 = vector.broadcast %3 : vector<64x1xf32> to vector<64x16xf32>
    %9 = arith.addf %7, %8 : vector<64x16xf32>
    %cst_10 = arith.constant 0.000000e+00 : f32
    %10 = vector.broadcast %cst_10 : f32 to vector<64x16xf32>
    %11 = arith.maximumf %9, %10 : vector<64x16xf32>
    %cst_11 = arith.constant dense<0.000000e+00> : vector<64x16xf32>
    %12 = tpu.matmul %2, %11, %cst_11 {dimension_numbers = #tpu.dot_dimension_numbers<[1], [0], [0], [1], [0, 0, 1, 1], [], []>} : vector<64x64xf32>, vector<64x16xf32>, vector<64x16xf32> -> vector<64x16xf32>
    %13 = vector.broadcast %4 : vector<64x1xf32> to vector<64x16xf32>
    %14 = arith.addf %12, %13 : vector<64x16xf32>
    %cst_12 = arith.constant 0.000000e+00 : f32
    %15 = vector.broadcast %cst_12 : f32 to vector<64x16xf32>
    %16 = arith.maximumf %14, %15 : vector<64x16xf32>
    %17 = vector.broadcast %5 : vector<64x1xf32> to vector<64x16xf32>
    %18 = arith.mulf %16, %17 : vector<64x16xf32>
    %cst_13 = arith.constant dense<0.000000e+00> : vector<16xf32>
    %19 = vector.multi_reduction <add>, %18, %cst_13 [0] : vector<64x16xf32> to vector<16xf32>
    %20 = vector.shape_cast %19 : vector<16xf32> to vector<1x16xf32>
    %21 = vector.broadcast %6 : vector<1x1xf32> to vector<1x16xf32>
    %22 = arith.addf %20, %21 : vector<1x16xf32>
    %c0_14 = arith.constant 0 : index
    %c0_15 = arith.constant 0 : index
    %c0_16 = arith.constant 0 : index
    %23 = vector.load %arg5[%c0_14, %c0_15, %c0_16] : memref<1x1x16xf32, #tpu.memory_space<vmem>>, vector<1x1x16xf32>
    %24 = vector.shape_cast %23 : vector<1x1x16xf32> to vector<1x16xf32>
    %25 = vector.shape_cast %22 : vector<1x16xf32> to vector<1x1x16xf32>
    tpu.vector_store %arg5[%c0_14, %c0_15, %c0_16], %25 {strides = array<i32>} : memref<1x1x16xf32, #tpu.memory_space<vmem>>, vector<1x1x16xf32>,
    return
  }
  func.func @transform_0(%arg0: i32) -> (i32, i32) {
    %c0_i32 = arith.constant 0 : i32
    %c0_i32_0 = arith.constant 0 : i32
    return %arg0, %c0_i32 : i32, i32
  }
  func.func @transform_1(%arg0: i32) -> (i32, i32) {
    %c0_i32 = arith.constant 0 : i32
    %c0_i32_0 = arith.constant 0 : i32
    %c0_i32_1 = arith.constant 0 : i32
    return %c0_i32, %c0_i32_0 : i32, i32
  }
  func.func @transform_2(%arg0: i32) -> (i32, i32) {
    %c0_i32 = arith.constant 0 : i32
    %c0_i32_0 = arith.constant 0 : i32
    %c0_i32_1 = arith.constant 0 : i32
    return %c0_i32, %c0_i32_0 : i32, i32
  }
  func.func @transform_3(%arg0: i32) -> (i32, i32) {
    %c0_i32 = arith.constant 0 : i32
    %c0_i32_0 = arith.constant 0 : i32
    %c0_i32_1 = arith.constant 0 : i32
    return %c0_i32, %c0_i32_0 : i32, i32
  }
  func.func @transform_4(%arg0: i32) -> (i32, i32, i32) {
    %c0_i32 = arith.constant 0 : i32
    %c0_i32_0 = arith.constant 0 : i32
    %c0_i32_1 = arith.constant 0 : i32
    return %arg0, %c0_i32, %c0_i32_0 : i32, i32, i32
  }
}

</mosaic_0001>

<llo_original>
// kernel: tpu_custom_call.1
$region0: #{tpu_custom_call.1}
  #allocation0 [shape = 'u32[]', space=smem, size = 0x4, offset = 0x4, fixed_abs, tag = 'smem constant byte address 0x4 - core index']
  #allocation1 [shape = 'u32[144,128]{1,0:T(1,128)}', space=vmem, size = 0x12000, scoped, tag = 'internal scratch']
  %s0 = inlined_call_operand.vmem [shape: f32[8,16], index: 0, kind: input, shape index: {}]
  %s1 = inlined_call_operand.vmem [shape: f32[64,16], index: 1, kind: input, shape index: {}]
  %s2 = inlined_call_operand.vmem [shape: f32[64,64], index: 2, kind: input, shape index: {}]
  %s3 = inlined_call_operand.vmem [shape: f32[64,4], index: 3, kind: input, shape index: {}]
  %s4 = inlined_call_operand.hbm [shape: f32[1,1,16], index: 4, kind: output, shape index: {}]
  %s5 = sld [smem:[#allocation0]]
  $region26: #{tpu_custom_call.1} parent=0
    _
  %s7 = ssub.s32 1, %s5
  %s8 = scalar_select 0, %s7, %s5
  $region1: #{tpu_custom_call.1} parent=0
    #allocation2 [shape = 'u8[512]{0}', space=vmem, size = 0x400, scoped, tag = 'output window, operand 0, single buffered']
    #allocation3 [shape = 's32[1]{0}', space=sflag, size = 0x4, scoped, tag = 'scoped memory for tpu_custom_call.1']
    %9 = vsyncpa [#allocation3], 0
    // Predicated region
    $region2: #{tpu_custom_call.1} parent=1 // pred_check
      _
    $region3: #{tpu_custom_call.1} parent=1 // pred_check_branch
      %11 = sbr.rel (0) target = $region5
    $region4: #{tpu_custom_call.1} parent=1 // pred_region
      _
    $region5: #{tpu_custom_call.1} parent=1 // pred_fallthru
      _
    // Predicated region
    $region6: #{tpu_custom_call.1} parent=1 // pred_check
      _
    $region7: #{tpu_custom_call.1} parent=1 // pred_check_branch
      %13 = sbr.rel (0) target = $region9
    $region8: #{tpu_custom_call.1} parent=1 // pred_region
      _
    $region9: #{tpu_custom_call.1} parent=1 // pred_fallthru
      _
    // Predicated region
    $region10: #{tpu_custom_call.1} parent=1 // pred_check
      _
    $region11: #{tpu_custom_call.1} parent=1 // pred_check_branch
      %15 = sbr.rel (0) target = $region13
    $region12: #{tpu_custom_call.1} parent=1 // pred_region
      _
    $region13: #{tpu_custom_call.1} parent=1 // pred_fallthru
      _
    // Predicated region
    $region14: #{tpu_custom_call.1} parent=1 // pred_check
      _
    $region15: #{tpu_custom_call.1} parent=1 // pred_check_branch
      %17 = sbr.rel (0) target = $region17
    $region16: #{tpu_custom_call.1} parent=1 // pred_region
      _
    $region17: #{tpu_custom_call.1} parent=1 // pred_fallthru
      _
    %v18 = vld [vmem:[%s0] sm:$0xff]
    %v19 = vld [vmem:[%s0 + $0x8] sm:$0xff]
    %v20 = vld [vmem:[%s1] sm:$0xff]
    %v21 = vld [vmem:[%s1 + $0x8] sm:$0xff]
    %v22 = vld [vmem:[%s1 + $0x10] sm:$0xff]
    %v23 = vld [vmem:[%s1 + $0x18] sm:$0xff]
    %v24 = vld [vmem:[%s1 + $0x20] sm:$0xff]
    %v25 = vld [vmem:[%s1 + $0x28] sm:$0xff]
    %v26 = vld [vmem:[%s1 + $0x30] sm:$0xff]
    %v27 = vld [vmem:[%s1 + $0x38] sm:$0xff]
    %v28 = vld [vmem:[%s2] sm:$0xff]
    %v29 = vld [vmem:[%s2 + $0x8] sm:$0xff]
    %v30 = vld [vmem:[%s2 + $0x10] sm:$0xff]
    %v31 = vld [vmem:[%s2 + $0x18] sm:$0xff]
    %v32 = vld [vmem:[%s2 + $0x20] sm:$0xff]
    %v33 = vld [vmem:[%s2 + $0x28] sm:$0xff]
    %v34 = vld [vmem:[%s2 + $0x30] sm:$0xff]
    %v35 = vld [vmem:[%s2 + $0x38] sm:$0xff]
    %v36 = vld [vmem:[%s3] sm:$0xff]
    %v37 = vld [vmem:[%s3 + $0x8] sm:$0xff]
    %v38 = vld [vmem:[%s3 + $0x10] sm:$0xff]
    %v39 = vld [vmem:[%s3 + $0x18] sm:$0xff]
    %v40 = vld [vmem:[%s3 + $0x20] sm:$0xff]
    %v41 = vld [vmem:[%s3 + $0x28] sm:$0xff]
    %v42 = vld [vmem:[%s3 + $0x30] sm:$0xff]
    %v43 = vld [vmem:[%s3 + $0x38] sm:$0xff]
    %v44 = vld [vmem:[%s3] sm:$0x1]
    %46 = vset.pattern.permute.xlu0 0
    %47 = vperm.xlu0 %46, %v36
    %v48 = vpop.permute.xlu0 %47
    %51 = vset.pattern.permute.xlu0 0
    %52 = vperm.xlu0 %51, %v37
    %v53 = vpop.permute.xlu0 %52
    %56 = vset.pattern.permute.xlu0 0
    %57 = vperm.xlu0 %56, %v38
    %v58 = vpop.permute.xlu0 %57
    %61 = vset.pattern.permute.xlu0 0
    %62 = vperm.xlu0 %61, %v39
    %v63 = vpop.permute.xlu0 %62
    %66 = vset.pattern.permute.xlu0 0
    %67 = vperm.xlu0 %66, %v40
    %v68 = vpop.permute.xlu0 %67
    %71 = vset.pattern.permute.xlu0 0
    %72 = vperm.xlu0 %71, %v41
    %v73 = vpop.permute.xlu0 %72
    %76 = vset.pattern.permute.xlu0 0
    %77 = vperm.xlu0 %76, %v42
    %v78 = vpop.permute.xlu0 %77
    %81 = vset.pattern.permute.xlu0 0
    %82 = vperm.xlu0 %81, %v43
    %v83 = vpop.permute.xlu0 %82
    %vm85 = vcmask 130048
    %v87 = vsel %vm85, %v20, 0
    %v90 = vsel %vm85, %v21, 0
    %v93 = vsel %vm85, %v22, 0
    %v96 = vsel %vm85, %v23, 0
    %v99 = vsel %vm85, %v24, 0
    %v102 = vsel %vm85, %v25, 0
    %v105 = vsel %vm85, %v26, 0
    %v108 = vsel %vm85, %v27, 0
    %v111 = vsel %vm85, %v18, 0
    %v114 = vsel %vm85, %v19, 0
    %116 = vmatprep.subr.mxu0 0.0
    %117 = vmatpush1.xpose.msra.mxu0 %v111
    %118 = vmatprep.subr.mxu0 0.0
    %119 = vmatpush1.xpose.msra.mxu0 %v114
    %120 = vmatprep.subr.mxu0 0.0
    %121 = vmatpush1.xpose.msra.mxu0 0.0
    %122 = vmatprep.subr.mxu0 0.0
    %123 = vmatpush1.xpose.msra.mxu0 0.0
    %124 = vmatprep.subr.mxu0 0.0
    %125 = vmatpush1.xpose.msra.mxu0 0.0
    %126 = vmatprep.subr.mxu0 0.0
    %127 = vmatpush1.xpose.msra.mxu0 0.0
    %128 = vmatprep.subr.mxu0 0.0
    %129 = vmatpush1.xpose.msra.mxu0 0.0
    %130 = vmatprep.subr.mxu0 0.0
    %131 = vmatpush1.xpose.msra.mxu0 0.0
    %132 = vmatprep.subr.mxu0 0.0
    %133 = vmatpush1.xpose.msra.mxu0 0.0
    %134 = vmatprep.subr.mxu0 0.0
    %135 = vmatpush1.xpose.msra.mxu0 0.0
    %136 = vmatprep.subr.mxu0 0.0
    %137 = vmatpush1.xpose.msra.mxu0 0.0
    %138 = vmatprep.subr.mxu0 0.0
    %139 = vmatpush1.xpose.msra.mxu0 0.0
    %140 = vmatprep.subr.mxu0 0.0
    %141 = vmatpush1.xpose.msra.mxu0 0.0
    %142 = vmatprep.subr.mxu0 0.0
    %143 = vmatpush1.xpose.msra.mxu0 0.0
    %144 = vmatprep.subr.mxu0 0.0
    %145 = vmatpush1.xpose.msra.mxu0 0.0
    %146 = vmatprep.subr.mxu0 0.0
    %147 = vmatpush1.xpose.msra.mxu0 0.0
    %148 = vmatprep.subr.mxu0 0.0
    %149 = vmatpush1.xpose.msra.mxu0 0.0
    %150 = vmatprep.subr.mxu0 0.0
    %151 = vmatpush1.xpose.msra.mxu0 0.0
    %152 = vmatprep.subr.mxu0 0.0
    %153 = vmatpush1.xpose.msra.mxu0 0.0
    %154 = vmatprep.subr.mxu0 0.0
    %155 = vmatpush1.xpose.msra.mxu0 0.0
    %156 = vmatprep.subr.mxu0 0.0
    %157 = vmatpush1.xpose.msra.mxu0 0.0
    %158 = vmatprep.subr.mxu0 0.0
    %159 = vmatpush1.xpose.msra.mxu0 0.0
    %160 = vmatprep.subr.mxu0 0.0
    %161 = vmatpush1.xpose.msra.mxu0 0.0
    %162 = vmatprep.subr.mxu0 0.0
    %163 = vmatpush1.xpose.msra.mxu0 0.0
    %164 = vmatprep.subr.mxu0 0.0
    %165 = vmatpush1.xpose.msra.mxu0 0.0
    %166 = vmatprep.subr.mxu0 0.0
    %167 = vmatpush1.xpose.msra.mxu0 0.0
    %168 = vmatprep.subr.mxu0 0.0
    %169 = vmatpush1.xpose.msra.mxu0 0.0
    %170 = vmatprep.subr.mxu0 0.0
    %171 = vmatpush1.xpose.msra.mxu0 0.0
    %172 = vmatprep.subr.mxu0 0.0
    %173 = vmatpush1.xpose.msra.mxu0 0.0
    %174 = vmatprep.subr.mxu0 0.0
    %175 = vmatpush1.xpose.msra.mxu0 0.0
    %176 = vmatprep.subr.mxu0 0.0
    %177 = vmatpush1.xpose.msra.mxu0 0.0
    %178 = vmatprep.subr.mxu0 0.0
    %179 = vmatpush1.xpose.msra.mxu0 0.0
    %180 = vmatprep.mubr.f32.mxu0 0.0
    %181 = vmatmul.mubr.f32.gmra.mrb[0].mxu0 %v87
    %v182 = vpop.f32.mrb[0].mxu0
    %v183 = vadd.f32 %v48, %v182
    %v184 = vpop.f32.mrb[0].mxu0
    %185 = vmatprep.mubr.f32.mxu0 0.0
    %186 = vmatmul.mubr.f32.gmra.mrb[0].mxu0 %v90
    %v187 = vpop.f32.mrb[0].mxu0
    %v188 = vadd.f32 %v53, %v187
    %v189 = vpop.f32.mrb[0].mxu0
    %190 = vmatprep.mubr.f32.mxu0 0.0
    %191 = vmatmul.mubr.f32.gmra.mrb[0].mxu0 %v93
    %v192 = vpop.f32.mrb[0].mxu0
    %v193 = vadd.f32 %v58, %v192
    %v194 = vpop.f32.mrb[0].mxu0
    %195 = vmatprep.mubr.f32.mxu0 0.0
    %196 = vmatmul.mubr.f32.gmra.mrb[0].mxu0 %v96
    %v197 = vpop.f32.mrb[0].mxu0
    %v198 = vadd.f32 %v63, %v197
    %v199 = vpop.f32.mrb[0].mxu0
    %200 = vmatprep.mubr.f32.mxu0 0.0
    %201 = vmatmul.mubr.f32.gmra.mrb[0].mxu0 %v99
    %v202 = vpop.f32.mrb[0].mxu0
    %v203 = vadd.f32 %v68, %v202
    %v204 = vpop.f32.mrb[0].mxu0
    %205 = vmatprep.mubr.f32.mxu0 0.0
    %206 = vmatmul.mubr.f32.gmra.mrb[0].mxu0 %v102
    %v207 = vpop.f32.mrb[0].mxu0
    %v208 = vadd.f32 %v73, %v207
    %v209 = vpop.f32.mrb[0].mxu0
    %210 = vmatprep.mubr.f32.mxu0 0.0
    %211 = vmatmul.mubr.f32.gmra.mrb[0].mxu0 %v105
    %v212 = vpop.f32.mrb[0].mxu0
    %v213 = vadd.f32 %v78, %v212
    %v214 = vpop.f32.mrb[0].mxu0
    %215 = vmatprep.mubr.f32.mxu0 0.0
    %216 = vmatmul.mubr.f32.gmra.mrb[0].mxu0 %v108
    %v217 = vpop.f32.mrb[0].mxu0
    %v218 = vadd.f32 %v83, %v217
    %v219 = vpop.f32.mrb[0].mxu0
    %220 = vdwg.mxu0
    %v221 = vmax.f32 %v183, 0.0
    %v222 = vmax.f32 %v188, 0.0
    %v223 = vmax.f32 %v193, 0.0
    %v224 = vmax.f32 %v198, 0.0
    %v225 = vmax.f32 %v203, 0.0
    %v226 = vmax.f32 %v208, 0.0
    %v227 = vmax.f32 %v213, 0.0
    %v228 = vmax.f32 %v218, 0.0
    %229 = vset.pattern.permute.xlu0 1
    %230 = vperm.xlu0 %229, %v36
    %v231 = vpop.permute.xlu0 %230
    %233 = vset.pattern.permute.xlu0 1
    %234 = vperm.xlu0 %233, %v37
    %v235 = vpop.permute.xlu0 %234
    %237 = vset.pattern.permute.xlu0 1
    %238 = vperm.xlu0 %237, %v38
    %v239 = vpop.permute.xlu0 %238
    %241 = vset.pattern.permute.xlu0 1
    %242 = vperm.xlu0 %241, %v39
    %v243 = vpop.permute.xlu0 %242
    %245 = vset.pattern.permute.xlu0 1
    %246 = vperm.xlu0 %245, %v40
    %v247 = vpop.permute.xlu0 %246
    %249 = vset.pattern.permute.xlu0 1
    %250 = vperm.xlu0 %249, %v41
    %v251 = vpop.permute.xlu0 %250
    %253 = vset.pattern.permute.xlu0 1
    %254 = vperm.xlu0 %253, %v42
    %v255 = vpop.permute.xlu0 %254
    %257 = vset.pattern.permute.xlu0 1
    %258 = vperm.xlu0 %257, %v43
    %v259 = vpop.permute.xlu0 %258
    %vm261 = vcmask 523264
    %v263 = vsel %vm261, %v28, 0
    %v266 = vsel %vm261, %v29, 0
    %v269 = vsel %vm261, %v30, 0
    %v272 = vsel %vm261, %v31, 0
    %v275 = vsel %vm261, %v32, 0
    %v278 = vsel %vm261, %v33, 0
    %v281 = vsel %vm261, %v34, 0
    %v284 = vsel %vm261, %v35, 0
    %286 = vmatprep.subr.mxu0 0.0
    %287 = vmatpush1.msra.mxu0 %v221
    %288 = vmatprep.subr.mxu0 0.0
    %289 = vmatpush1.msra.mxu0 %v222
    %290 = vmatprep.subr.mxu0 0.0
    %291 = vmatpush1.msra.mxu0 %v223
    %292 = vmatprep.subr.mxu0 0.0
    %293 = vmatpush1.msra.mxu0 %v224
    %294 = vmatprep.subr.mxu0 0.0
    %295 = vmatpush1.msra.mxu0 %v225
    %296 = vmatprep.subr.mxu0 0.0
    %297 = vmatpush1.msra.mxu0 %v226
    %298 = vmatprep.subr.mxu0 0.0
    %299 = vmatpush1.msra.mxu0 %v227
    %300 = vmatprep.subr.mxu0 0.0
    %301 = vmatpush1.msra.mxu0 %v228
    %302 = vmatprep.subr.mxu0 0.0
    %303 = vmatpush1.msra.mxu0 0.0
    %304 = vmatprep.subr.mxu0 0.0
    %305 = vmatpush1.msra.mxu0 0.0
    %306 = vmatprep.subr.mxu0 0.0
    %307 = vmatpush1.msra.mxu0 0.0
    %308 = vmatprep.subr.mxu0 0.0
    %309 = vmatpush1.msra.mxu0 0.0
    %310 = vmatprep.subr.mxu0 0.0
    %311 = vmatpush1.msra.mxu0 0.0
    %312 = vmatprep.subr.mxu0 0.0
    %313 = vmatpush1.msra.mxu0 0.0
    %314 = vmatprep.subr.mxu0 0.0
    %315 = vmatpush1.msra.mxu0 0.0
    %316 = vmatprep.subr.mxu0 0.0
    %317 = vmatpush1.msra.mxu0 0.0
    %318 = vmatprep.subr.mxu0 0.0
    %319 = vmatpush1.msra.mxu0 0.0
    %320 = vmatprep.subr.mxu0 0.0
    %321 = vmatpush1.msra.mxu0 0.0
    %322 = vmatprep.subr.mxu0 0.0
    %323 = vmatpush1.msra.mxu0 0.0
    %324 = vmatprep.subr.mxu0 0.0
    %325 = vmatpush1.msra.mxu0 0.0
    %326 = vmatprep.subr.mxu0 0.0
    %327 = vmatpush1.msra.mxu0 0.0
    %328 = vmatprep.subr.mxu0 0.0
    %329 = vmatpush1.msra.mxu0 0.0
    %330 = vmatprep.subr.mxu0 0.0
    %331 = vmatpush1.msra.mxu0 0.0
    %332 = vmatprep.subr.mxu0 0.0
    %333 = vmatpush1.msra.mxu0 0.0
    %334 = vmatprep.subr.mxu0 0.0
    %335 = vmatpush1.msra.mxu0 0.0
    %336 = vmatprep.subr.mxu0 0.0
    %337 = vmatpush1.msra.mxu0 0.0
    %338 = vmatprep.subr.mxu0 0.0
    %339 = vmatpush1.msra.mxu0 0.0
    %340 = vmatprep.subr.mxu0 0.0
    %341 = vmatpush1.msra.mxu0 0.0
    %342 = vmatprep.subr.mxu0 0.0
    %343 = vmatpush1.msra.mxu0 0.0
    %344 = vmatprep.subr.mxu0 0.0
    %345 = vmatpush1.msra.mxu0 0.0
    %346 = vmatprep.subr.mxu0 0.0
    %347 = vmatpush1.msra.mxu0 0.0
    %348 = vmatprep.subr.mxu0 0.0
    %349 = vmatpush1.msra.mxu0 0.0
    %350 = vmatprep.mubr.f32.mxu0 0.0
    %351 = vmatmul.mubr.f32.gmra.mrb[0].mxu0 %v263
    %v352 = vpop.f32.mrb[0].mxu0
    %v353 = vadd.f32 %v231, %v352
    %v354 = vpop.f32.mrb[0].mxu0
    %355 = vmatprep.mubr.f32.mxu0 0.0
    %356 = vmatmul.mubr.f32.gmra.mrb[0].mxu0 %v266
    %v357 = vpop.f32.mrb[0].mxu0
    %v358 = vadd.f32 %v235, %v357
    %v359 = vpop.f32.mrb[0].mxu0
    %360 = vmatprep.mubr.f32.mxu0 0.0
    %361 = vmatmul.mubr.f32.gmra.mrb[0].mxu0 %v269
    %v362 = vpop.f32.mrb[0].mxu0
    %v363 = vadd.f32 %v239, %v362
    %v364 = vpop.f32.mrb[0].mxu0
    %365 = vmatprep.mubr.f32.mxu0 0.0
    %366 = vmatmul.mubr.f32.gmra.mrb[0].mxu0 %v272
    %v367 = vpop.f32.mrb[0].mxu0
    %v368 = vadd.f32 %v243, %v367
    %v369 = vpop.f32.mrb[0].mxu0
    %370 = vmatprep.mubr.f32.mxu0 0.0
    %371 = vmatmul.mubr.f32.gmra.mrb[0].mxu0 %v275
    %v372 = vpop.f32.mrb[0].mxu0
    %v373 = vadd.f32 %v247, %v372
    %v374 = vpop.f32.mrb[0].mxu0
    %375 = vmatprep.mubr.f32.mxu0 0.0
    %376 = vmatmul.mubr.f32.gmra.mrb[0].mxu0 %v278
    %v377 = vpop.f32.mrb[0].mxu0
    %v378 = vadd.f32 %v251, %v377
    %v379 = vpop.f32.mrb[0].mxu0
    %380 = vmatprep.mubr.f32.mxu0 0.0
    %381 = vmatmul.mubr.f32.gmra.mrb[0].mxu0 %v281
    %v382 = vpop.f32.mrb[0].mxu0
    %v383 = vadd.f32 %v255, %v382
    %v384 = vpop.f32.mrb[0].mxu0
    %385 = vmatprep.mubr.f32.mxu0 0.0
    %386 = vmatmul.mubr.f32.gmra.mrb[0].mxu0 %v284
    %v387 = vpop.f32.mrb[0].mxu0
    %v388 = vadd.f32 %v259, %v387
    %v389 = vpop.f32.mrb[0].mxu0
    %390 = vdwg.mxu0
    %v391 = vmax.f32 %v353, 0.0
    %v392 = vmax.f32 %v358, 0.0
    %v393 = vmax.f32 %v363, 0.0
    %v394 = vmax.f32 %v368, 0.0
    %v395 = vmax.f32 %v373, 0.0
    %v396 = vmax.f32 %v378, 0.0
    %v397 = vmax.f32 %v383, 0.0
    %v398 = vmax.f32 %v388, 0.0
    %399 = vset.pattern.permute.xlu0 2
    %400 = vperm.xlu0 %399, %v36
    %v401 = vpop.permute.xlu0 %400
    %403 = vset.pattern.permute.xlu0 2
    %404 = vperm.xlu0 %403, %v37
    %v405 = vpop.permute.xlu0 %404
    %407 = vset.pattern.permute.xlu0 2
    %408 = vperm.xlu0 %407, %v38
    %v409 = vpop.permute.xlu0 %408
    %411 = vset.pattern.permute.xlu0 2
    %412 = vperm.xlu0 %411, %v39
    %v413 = vpop.permute.xlu0 %412
    %415 = vset.pattern.permute.xlu0 2
    %416 = vperm.xlu0 %415, %v40
    %v417 = vpop.permute.xlu0 %416
    %419 = vset.pattern.permute.xlu0 2
    %420 = vperm.xlu0 %419, %v41
    %v421 = vpop.permute.xlu0 %420
    %423 = vset.pattern.permute.xlu0 2
    %424 = vperm.xlu0 %423, %v42
    %v425 = vpop.permute.xlu0 %424
    %427 = vset.pattern.permute.xlu0 2
    %428 = vperm.xlu0 %427, %v43
    %v429 = vpop.permute.xlu0 %428
    %v431 = vmul.f32 %v391, %v401
    %v432 = vmul.f32 %v392, %v405
    %v433 = vmul.f32 %v393, %v409
    %v434 = vmul.f32 %v394, %v413
    %v435 = vmul.f32 %v395, %v417
    %v436 = vmul.f32 %v396, %v421
    %v437 = vmul.f32 %v397, %v425
    %v438 = vmul.f32 %v398, %v429
    %v439 = vsel %vm85, %v431, 0.0
    %v440 = vsel %vm85, %v432, 0.0
    %v441 = vadd.f32 %v439, %v440
    %v442 = vsel %vm85, %v433, 0.0
    %v443 = vadd.f32 %v441, %v442
    %v444 = vsel %vm85, %v434, 0.0
    %v445 = vadd.f32 %v443, %v444
    %v446 = vsel %vm85, %v435, 0.0
    %v447 = vadd.f32 %v445, %v446
    %v448 = vsel %vm85, %v436, 0.0
    %v449 = vadd.f32 %v447, %v448
    %v450 = vsel %vm85, %v437, 0.0
    %v451 = vadd.f32 %v449, %v450
    %v452 = vsel %vm85, %v438, 0.0
    %v453 = vadd.f32 %v451, %v452
    %v454 = vrot.slane %v453, 4
    %v455 = vadd.f32 %v453, %v454
    %v456 = vrot.slane %v455, 2
    %v457 = vadd.f32 %v455, %v456
    %v458 = vrot.slane %v457, 1
    %v459 = vadd.f32 %v457, %v458
    %461 = vset.pattern.permute.xlu0 3
    %462 = vperm.xlu0 %461, %v44
    %v463 = vpop.permute.xlu0 %462
    %v465 = vadd.f32 %v459, %v463
    %vm466 = vcmask 122880
    %467 = vst.msk [vmem:[#allocation2] sm:$0x1] %vm466, %v465
    // Predicated region
    $region18: #{tpu_custom_call.1} parent=1 // pred_check
      _
    $region19: #{tpu_custom_call.1} parent=1 // pred_check_branch
      %469 = sbr.rel (0) target = $region21
    $region20: #{tpu_custom_call.1} parent=1 // pred_region
      %s471 = ssub.s32 16, 16
      %472 = vsyncadd [#allocation3], %s471
      %s474 = sshll.u32 [#allocation2], 4
      %s475 = int_to_ptr.vmem [resolvable:$true] %s474
      %477 = dma.vmem_to_hbm [thread:$0]  %s475, 16, %s4, [#allocation3]
    $region21: #{tpu_custom_call.1} parent=1 // pred_fallthru
      _
    // Predicated region
    $region22: #{tpu_custom_call.1} parent=1 // pred_check
      _
    $region23: #{tpu_custom_call.1} parent=1 // pred_check_branch
      %479 = sbr.rel (0) target = $region25
    $region24: #{tpu_custom_call.1} parent=1 // pred_region
      %480 = dma.done [#allocation3], 16
    $region25: #{tpu_custom_call.1} parent=1 // pred_fallthru
      _
    %481 = vsyncpa [#allocation3], 1

</llo_original>
